<compile_context>
chip_gen: v7x
topology: tpu7x:2x2x1
jax: 0.10.0
libtpu: 0.0.40
codegen_flags: <defaults>
</compile_context>

<pallas_src>
import jax
import jax.numpy as jnp
from jax.experimental import pallas as pl
from jax.experimental.pallas import tpu as pltpu

_LANE = 128
_SMALL_BATCH_FALLBACK = 256   # below this, plain XLA fusion beats a Pallas launch
_TILE_B_CAP = 2048            # per-tile row cap; VMEM residency stays a few MiB


def _round_up(n, m):
    return ((n + m - 1) // m) * m


def _cdiv(a, b):
    return -(-a // b)


def _device_kind():
    try:
        return jax.devices()[0].device_kind.lower()
    except Exception:
        return ""


def _is_v5e(kind):
    return ("v5e" in kind) or ("v5 lite" in kind) or ("v5litepod" in kind)


def _has_bf16_vpu(kind):
    # v6e / v7x have a bf16 VPU; v5e (and older) do not.
    return ("v6" in kind) or ("v7" in kind)


def _sublane(compute_dtype):
    # bf16 packs 16 rows per vreg sublane group; f32 packs 8.
    return 16 if jnp.dtype(compute_dtype) == jnp.dtype(jnp.bfloat16) else 8


def _pick_tiling(batch, compute_dtype, kind):
    """tile_b / b_pad derived from B so the last tile is never mostly empty."""
    sub = _sublane(compute_dtype)
    b_aligned = _round_up(max(batch, 1), sub)
    n_tiles = max(1, _cdiv(b_aligned, _TILE_B_CAP))
    if "v7" in kind and b_aligned >= 2 * sub:
        # 2 TensorCores per chip: need >= 2 (even) batch tiles for the
        # "parallel" axis to shard across them.
        n_tiles = max(n_tiles, 2)
        if n_tiles % 2:
            n_tiles += 1
    tile_b = _round_up(_cdiv(b_aligned, n_tiles), sub)
    b_pad = _round_up(b_aligned, tile_b)
    return tile_b, b_pad


def _pad2d(a, rows, cols):
    return jnp.pad(a, ((0, rows - a.shape[0]), (0, cols - a.shape[1])))


def _mlp_kernel(x_ref,
                w1_ref, b1_ref,
                w2_ref, b2_ref,
                w3_ref, b3_ref,
                w4_ref, b4_ref,
                o_ref):
    """One batch tile of the fused 4-layer MLP.

    x_ref : (TILE_B, IN)       compute dtype, streamed tile-by-tile
    w*_ref: lane-padded weights, compute dtype, VMEM-resident across the grid
    b*_ref: (1, N_pad) biases in the epilogue dtype (f32 on v5e, bf16 on v6e/v7x)
    o_ref : (TILE_B, OUT_pad)  lane-dense output slab in compute dtype
    """
    compute_dtype = w1_ref.dtype
    epi_dtype = b1_ref.dtype   # bias-add / ReLU dtype (chip-dependent)

    x = x_ref[...]

    # input_block: Linear -> ReLU   (MXU accumulates in f32)
    h = jnp.dot(x, w1_ref[...], preferred_element_type=jnp.float32)
    h = jnp.maximum(h.astype(epi_dtype) + b1_ref[...], 0.0).astype(compute_dtype)

    # hidden_block: (Linear -> ReLU) x 2
    h = jnp.dot(h, w2_ref[...], preferred_element_type=jnp.float32)
    h = jnp.maximum(h.astype(epi_dtype) + b2_ref[...], 0.0).astype(compute_dtype)
    h = jnp.dot(h, w3_ref[...], preferred_element_type=jnp.float32)
    h = jnp.maximum(h.astype(epi_dtype) + b3_ref[...], 0.0).astype(compute_dtype)

    # dropout_block: identity at inference time (see TODO at top of file).

    # output_block: Linear (padded lane-dense output; wrapper slices real width)
    out = jnp.dot(h, w4_ref[...], preferred_element_type=jnp.float32)
    o_ref[...] = (out.astype(epi_dtype) + b4_ref[...]).astype(o_ref.dtype)


def _xla_forward(x, params):
    """Plain XLA path for small batches (launch-overhead dominated regime)."""
    h = x
    n = len(params)
    for i, (w, b) in enumerate(params):
        h = h @ w + b
        if i < n - 1:
            h = jnp.maximum(h, 0.0)
    return h


def model_l_forward(x, params, *, compute_dtype=jnp.bfloat16, force_pallas=False):
    """Fused ModelL forward.

    params: [(w1, b1), (w2, b2), (w3, b3), (w4, b4)] with w_i stored as
            (in_features, out_features) and b_i as (out_features,).
    """
    (w1, b1), (w2, b2), (w3, b3), (w4, b4) = params
    B, in_f = x.shape
    hid = w1.shape[1]
    out_f = w4.shape[1]

    # Small-batch fallback: for the shipped shape (B=2, 32-wide layers) the
    # Pallas custom-call launch + pad/slice wrapper dominate by orders of
    # magnitude; plain XLA fusion wins below a batch threshold on every chip.
    if B < _SMALL_BATCH_FALLBACK and not force_pallas:
        return _xla_forward(x, params)

    kind = _device_kind()
    compute_dtype = jnp.dtype(compute_dtype)
    is_f32 = compute_dtype == jnp.dtype(jnp.float32)

    # Bias-add / ReLU dtype: bf16 where the VPU supports it, else f32.
    if is_f32 or not _has_bf16_vpu(kind):
        epi_dtype = jnp.float32
    else:
        epi_dtype = jnp.bfloat16
    # Output slab follows compute dtype: bf16 writeback halves the dominant
    # HBM mover on the fast path; f32 slab keeps the exact path exact.
    out_dtype = jnp.float32 if is_f32 else jnp.bfloat16

    hid_p = _round_up(hid, _LANE)
    out_p = _round_up(out_f, _LANE)
    tile_b, b_pad = _pick_tiling(B, compute_dtype, kind)
    grid_steps = _cdiv(b_pad, tile_b)

    # bf16 activations/weights halve HBM bytes moved.
    xp = _pad2d(x, b_pad, in_f).astype(compute_dtype)
    w1p = _pad2d(w1, in_f, hid_p).astype(compute_dtype)
    w2p = _pad2d(w2, hid_p, hid_p).astype(compute_dtype)
    w3p = _pad2d(w3, hid_p, hid_p).astype(compute_dtype)
    w4p = _pad2d(w4, hid_p, out_p).astype(compute_dtype)
    b1p = _pad2d(b1.reshape(1, -1), 1, hid_p).astype(epi_dtype)
    b2p = _pad2d(b2.reshape(1, -1), 1, hid_p).astype(epi_dtype)
    b3p = _pad2d(b3.reshape(1, -1), 1, hid_p).astype(epi_dtype)
    b4p = _pad2d(b4.reshape(1, -1), 1, out_p).astype(epi_dtype)

    def resident(shape):
        # Same block index at every grid step -> DMA'd once, VMEM-resident.
        # TODO(synk): pipeline_mode=pl.Buffered(1) would drop the (unused)
        # second DMA buffer; negligible at hidden<=128, revisit if hid grows.
        return pl.BlockSpec(shape, lambda i: tuple(0 for _ in shape))

    # x streams tile-by-tile (double-buffered by the Pallas pipeline).  On
    # v5e with a long multi-tile grid, deepen the buffering to hide the input
    # DMA behind the lower HBM bandwidth.
    x_spec_kwargs = {}
    if _is_v5e(kind) and grid_steps > 2:
        x_spec_kwargs["pipeline_mode"] = pl.Buffered(3)
    x_spec = pl.BlockSpec((tile_b, in_f), lambda i: (i, 0), **x_spec_kwargs)

    out_padded = pl.pallas_call(
        _mlp_kernel,
        out_shape=jax.ShapeDtypeStruct((b_pad, out_p), out_dtype),
        grid=(grid_steps,),
        in_specs=[
            x_spec,
            resident(w1p.shape), resident(b1p.shape),
            resident(w2p.shape), resident(b2p.shape),
            resident(w3p.shape), resident(b3p.shape),
            resident(w4p.shape), resident(b4p.shape),
        ],
        # Lane-dense (>=128-wide) output slab -> unmasked full-width stores.
        out_specs=pl.BlockSpec((tile_b, out_p), lambda i: (i, 0)),
        compiler_params=pltpu.CompilerParams(
            # Batch tiles are independent: v7x shards them across its two
            # TensorCores; harmless on single-TC v5e/v6e.
            dimension_semantics=("parallel",),
        ),
    )(xp, w1p, b1p, w2p, b2p, w3p, b3p, w4p, b4p)

    return out_padded[:B, :out_f].astype(x.dtype)


def init_params(key, input_size, hidden_size, output_size):
    """PyTorch-nn.Linear-style init, weights pre-transposed to (in, out)."""
    dims = [(input_size, hidden_size),
            (hidden_size, hidden_size),
            (hidden_size, hidden_size),
            (hidden_size, output_size)]
    params = []
    for (fan_in, fan_out) in dims:
        key, kw, kb = jax.random.split(key, 3)
        bound = 1.0 / jnp.sqrt(float(fan_in))
        w = jax.random.uniform(kw, (fan_in, fan_out), jnp.float32, -bound, bound)
        b = jax.random.uniform(kb, (fan_out,), jnp.float32, -bound, bound)
        params.append((w, b))
    return params


def reference_forward(x, params):
    h = x
    for i, (w, b) in enumerate(params):
        h = h @ w + b
        if i < 3:
            h = jnp.maximum(h, 0.0)
    return h


if __name__ == "__main__":
    # Shapes implied by the module's config keys:
    #   linear_input_size=32, linear_hidden_size=32, output_size=4, batch=2
    input_size, hidden_size, output_size = 32, 32, 4
    batch = 2

    key = jax.random.PRNGKey(0)
    key, kx, kx2 = jax.random.split(key, 3)
    x = jax.random.normal(kx, (batch, input_size), jnp.float32)
    params = init_params(key, input_size, hidden_size, output_size)
    ref = reference_forward(x, params)

    # (a) shipped small-batch shape: takes the XLA fallback path.
    out_fb = jax.block_until_ready(model_l_forward(x, params))
    assert out_fb.shape == (batch, output_size), out_fb.shape
    assert jnp.allclose(out_fb, ref, atol=1e-5, rtol=1e-5), "fallback mismatch"

    # (b) Pallas kernel, f32 exact path (f32 slab, f32 epilogue).
    out_f32 = jax.block_until_ready(
        model_l_forward(x, params, compute_dtype=jnp.float32, force_pallas=True))
    assert out_f32.shape == (batch, output_size), out_f32.shape
    assert jnp.allclose(out_f32, ref, atol=1e-5, rtol=1e-5), "f32 mismatch"

    # (c) Pallas kernel, default bf16 fast path (bf16 slab / epilogue on v6e+).
    out_bf = jax.block_until_ready(model_l_forward(x, params, force_pallas=True))
    assert out_bf.shape == (batch, output_size), out_bf.shape
    assert jnp.allclose(out_bf, ref, atol=3e-2, rtol=3e-2), "bf16 mismatch"

    # (d) large batch: Pallas path chosen automatically, B-derived tiling,
    #     weights VMEM-resident across batch tiles.
    xb = jax.random.normal(kx2, (1024, input_size), jnp.float32)
    outb = jax.block_until_ready(model_l_forward(xb, params))
    refb = reference_forward(xb, params)
    assert outb.shape == (1024, output_size), outb.shape
    assert jnp.allclose(outb, refb, atol=3e-2, rtol=3e-2), "batched mismatch"

    print("KERNEL_OK")
</pallas_src>

<mosaic_0001>
module attributes {stable_mosaic.version = 11 : i64} {
  func.func @_mlp_kernel(%arg0: i32, %arg1: memref<8x32xf32, #tpu.memory_space<vmem>>, %arg2: memref<32x128xf32, #tpu.memory_space<vmem>>, %arg3: memref<1x128xf32, #tpu.memory_space<vmem>>, %arg4: memref<128x128xf32, #tpu.memory_space<vmem>>, %arg5: memref<1x128xf32, #tpu.memory_space<vmem>>, %arg6: memref<128x128xf32, #tpu.memory_space<vmem>>, %arg7: memref<1x128xf32, #tpu.memory_space<vmem>>, %arg8: memref<128x128xf32, #tpu.memory_space<vmem>>, %arg9: memref<1x128xf32, #tpu.memory_space<vmem>>, %arg10: memref<8x128xf32, #tpu.memory_space<vmem>>) attributes {dimension_semantics = [#tpu.dimension_semantics<parallel>], iteration_bounds = array<i64: 1>, scalar_prefetch = 0 : i64, scratch_operands = 0 : i64, tpu.core_type = #tpu.core_type<tc>, window_params = [{transform_indices = @transform_0, window_bounds = array<i64: 8, 32>}, {pipeline_mode = #tpu.pipeline_mode<synchronous>, transform_indices = @transform_1, window_bounds = array<i64: 32, 128>}, {pipeline_mode = #tpu.pipeline_mode<synchronous>, transform_indices = @transform_2, window_bounds = array<i64: 1, 128>}, {pipeline_mode = #tpu.pipeline_mode<synchronous>, transform_indices = @transform_3, window_bounds = array<i64: 128, 128>}, {pipeline_mode = #tpu.pipeline_mode<synchronous>, transform_indices = @transform_4, window_bounds = array<i64: 1, 128>}, {pipeline_mode = #tpu.pipeline_mode<synchronous>, transform_indices = @transform_5, window_bounds = array<i64: 128, 128>}, {pipeline_mode = #tpu.pipeline_mode<synchronous>, transform_indices = @transform_6, window_bounds = array<i64: 1, 128>}, {pipeline_mode = #tpu.pipeline_mode<synchronous>, transform_indices = @transform_7, window_bounds = array<i64: 128, 128>}, {pipeline_mode = #tpu.pipeline_mode<synchronous>, transform_indices = @transform_8, window_bounds = array<i64: 1, 128>}, {transform_indices = @transform_9, window_bounds = array<i64: 8, 128>}]} {
    %c0 = arith.constant 0 : index
    %c0_0 = arith.constant 0 : index
    %0 = vector.load %arg1[%c0, %c0_0] : memref<8x32xf32, #tpu.memory_space<vmem>>, vector<8x32xf32>
    %c0_1 = arith.constant 0 : index
    %c0_2 = arith.constant 0 : index
    %1 = vector.load %arg2[%c0_1, %c0_2] : memref<32x128xf32, #tpu.memory_space<vmem>>, vector<32x128xf32>
    %cst = arith.constant dense<0.000000e+00> : vector<8x128xf32>
    %2 = tpu.matmul %0, %1, %cst {dimension_numbers = #tpu.dot_dimension_numbers<[1], [0], [0], [1], [0, 0, 1, 1], [], []>} : vector<8x32xf32>, vector<32x128xf32>, vector<8x128xf32> -> vector<8x128xf32>
    %c0_3 = arith.constant 0 : index
    %c0_4 = arith.constant 0 : index
    %3 = vector.load %arg3[%c0_3, %c0_4] : memref<1x128xf32, #tpu.memory_space<vmem>>, vector<1x128xf32>
    %4 = vector.broadcast %3 : vector<1x128xf32> to vector<8x128xf32>
    %5 = arith.addf %2, %4 : vector<8x128xf32>
    %cst_5 = arith.constant 0.000000e+00 : f32
    %6 = vector.broadcast %cst_5 : f32 to vector<8x128xf32>
    %7 = arith.maximumf %5, %6 : vector<8x128xf32>
    %c0_6 = arith.constant 0 : index
    %c0_7 = arith.constant 0 : index
    %8 = vector.load %arg4[%c0_6, %c0_7] : memref<128x128xf32, #tpu.memory_space<vmem>>, vector<128x128xf32>
    %cst_8 = arith.constant dense<0.000000e+00> : vector<8x128xf32>
    %9 = tpu.matmul %7, %8, %cst_8 {dimension_numbers = #tpu.dot_dimension_numbers<[1], [0], [0], [1], [0, 0, 1, 1], [], []>} : vector<8x128xf32>, vector<128x128xf32>, vector<8x128xf32> -> vector<8x128xf32>
    %c0_9 = arith.constant 0 : index
    %c0_10 = arith.constant 0 : index
    %10 = vector.load %arg5[%c0_9, %c0_10] : memref<1x128xf32, #tpu.memory_space<vmem>>, vector<1x128xf32>
    %11 = vector.broadcast %10 : vector<1x128xf32> to vector<8x128xf32>
    %12 = arith.addf %9, %11 : vector<8x128xf32>
    %cst_11 = arith.constant 0.000000e+00 : f32
    %13 = vector.broadcast %cst_11 : f32 to vector<8x128xf32>
    %14 = arith.maximumf %12, %13 : vector<8x128xf32>
    %c0_12 = arith.constant 0 : index
    %c0_13 = arith.constant 0 : index
    %15 = vector.load %arg6[%c0_12, %c0_13] : memref<128x128xf32, #tpu.memory_space<vmem>>, vector<128x128xf32>
    %cst_14 = arith.constant dense<0.000000e+00> : vector<8x128xf32>
    %16 = tpu.matmul %14, %15, %cst_14 {dimension_numbers = #tpu.dot_dimension_numbers<[1], [0], [0], [1], [0, 0, 1, 1], [], []>} : vector<8x128xf32>, vector<128x128xf32>, vector<8x128xf32> -> vector<8x128xf32>
    %c0_15 = arith.constant 0 : index
    %c0_16 = arith.constant 0 : index
    %17 = vector.load %arg7[%c0_15, %c0_16] : memref<1x128xf32, #tpu.memory_space<vmem>>, vector<1x128xf32>
    %18 = vector.broadcast %17 : vector<1x128xf32> to vector<8x128xf32>
    %19 = arith.addf %16, %18 : vector<8x128xf32>
    %cst_17 = arith.constant 0.000000e+00 : f32
    %20 = vector.broadcast %cst_17 : f32 to vector<8x128xf32>
    %21 = arith.maximumf %19, %20 : vector<8x128xf32>
    %c0_18 = arith.constant 0 : index
    %c0_19 = arith.constant 0 : index
    %22 = vector.load %arg8[%c0_18, %c0_19] : memref<128x128xf32, #tpu.memory_space<vmem>>, vector<128x128xf32>
    %cst_20 = arith.constant dense<0.000000e+00> : vector<8x128xf32>
    %23 = tpu.matmul %21, %22, %cst_20 {dimension_numbers = #tpu.dot_dimension_numbers<[1], [0], [0], [1], [0, 0, 1, 1], [], []>} : vector<8x128xf32>, vector<128x128xf32>, vector<8x128xf32> -> vector<8x128xf32>
    %c0_21 = arith.constant 0 : index
    %c0_22 = arith.constant 0 : index
    %24 = vector.load %arg9[%c0_21, %c0_22] : memref<1x128xf32, #tpu.memory_space<vmem>>, vector<1x128xf32>
    %25 = vector.broadcast %24 : vector<1x128xf32> to vector<8x128xf32>
    %26 = arith.addf %23, %25 : vector<8x128xf32>
    %c0_23 = arith.constant 0 : index
    %c0_24 = arith.constant 0 : index
    %27 = vector.load %arg10[%c0_23, %c0_24] : memref<8x128xf32, #tpu.memory_space<vmem>>, vector<8x128xf32>
    tpu.vector_store %arg10[%c0_23, %c0_24], %26 {strides = array<i32>} : memref<8x128xf32, #tpu.memory_space<vmem>>, vector<8x128xf32>,
    return
  }
  func.func @transform_0(%arg0: i32) -> (i32, i32) {
    %c0_i32 = arith.constant 0 : i32
    %c0_i32_0 = arith.constant 0 : i32
    return %arg0, %c0_i32 : i32, i32
  }
  func.func @transform_1(%arg0: i32) -> (i32, i32) {
    %c0_i32 = arith.constant 0 : i32
    %c0_i32_0 = arith.constant 0 : i32
    %c0_i32_1 = arith.constant 0 : i32
    return %c0_i32, %c0_i32_0 : i32, i32
  }
  func.func @transform_2(%arg0: i32) -> (i32, i32) {
    %c0_i32 = arith.constant 0 : i32
    %c0_i32_0 = arith.constant 0 : i32
    %c0_i32_1 = arith.constant 0 : i32
    return %c0_i32, %c0_i32_0 : i32, i32
  }
  func.func @transform_3(%arg0: i32) -> (i32, i32) {
    %c0_i32 = arith.constant 0 : i32
    %c0_i32_0 = arith.constant 0 : i32
    %c0_i32_1 = arith.constant 0 : i32
    return %c0_i32, %c0_i32_0 : i32, i32
  }
  func.func @transform_4(%arg0: i32) -> (i32, i32) {
    %c0_i32 = arith.constant 0 : i32
    %c0_i32_0 = arith.constant 0 : i32
    %c0_i32_1 = arith.constant 0 : i32
    return %c0_i32, %c0_i32_0 : i32, i32
  }
  func.func @transform_5(%arg0: i32) -> (i32, i32) {
    %c0_i32 = arith.constant 0 : i32
    %c0_i32_0 = arith.constant 0 : i32
    %c0_i32_1 = arith.constant 0 : i32
    return %c0_i32, %c0_i32_0 : i32, i32
  }
  func.func @transform_6(%arg0: i32) -> (i32, i32) {
    %c0_i32 = arith.constant 0 : i32
    %c0_i32_0 = arith.constant 0 : i32
    %c0_i32_1 = arith.constant 0 : i32
    return %c0_i32, %c0_i32_0 : i32, i32
  }
  func.func @transform_7(%arg0: i32) -> (i32, i32) {
    %c0_i32 = arith.constant 0 : i32
    %c0_i32_0 = arith.constant 0 : i32
    %c0_i32_1 = arith.constant 0 : i32
    return %c0_i32, %c0_i32_0 : i32, i32
  }
  func.func @transform_8(%arg0: i32) -> (i32, i32) {
    %c0_i32 = arith.constant 0 : i32
    %c0_i32_0 = arith.constant 0 : i32
    %c0_i32_1 = arith.constant 0 : i32
    return %c0_i32, %c0_i32_0 : i32, i32
  }
  func.func @transform_9(%arg0: i32) -> (i32, i32) {
    %c0_i32 = arith.constant 0 : i32
    %c0_i32_0 = arith.constant 0 : i32
    return %arg0, %c0_i32 : i32, i32
  }
}

</mosaic_0001>

<llo_original>
// kernel: tpu_custom_call.1
$region0: #{tpu_custom_call.1}
  #allocation0 [shape = 'u32[]', space=smem, size = 0x4, offset = 0x4, fixed_abs, tag = 'smem constant byte address 0x4 - core index']
  #allocation1 [shape = 'u32[144,128]{1,0:T(1,128)}', space=vmem, size = 0x12000, scoped, tag = 'internal scratch']
  %s0 = inlined_call_operand.hbm [shape: f32[8,32], index: 0, kind: input, shape index: {}]
  %s1 = inlined_call_operand.hbm [shape: f32[32,128], index: 1, kind: input, shape index: {}]
  %s2 = inlined_call_operand.vmem [shape: f32[1,128], index: 2, kind: input, shape index: {}]
  %s3 = inlined_call_operand.hbm [shape: f32[128,128], index: 3, kind: input, shape index: {}]
  %s4 = inlined_call_operand.vmem [shape: f32[1,128], index: 4, kind: input, shape index: {}]
  %s5 = inlined_call_operand.hbm [shape: f32[128,128], index: 5, kind: input, shape index: {}]
  %s6 = inlined_call_operand.vmem [shape: f32[1,128], index: 6, kind: input, shape index: {}]
  %s7 = inlined_call_operand.hbm [shape: f32[128,128], index: 7, kind: input, shape index: {}]
  %s8 = inlined_call_operand.vmem [shape: f32[1,128], index: 8, kind: input, shape index: {}]
  %s9 = inlined_call_operand.hbm [shape: f32[8,128], index: 9, kind: output, shape index: {}]
  %s10 = sld [smem:[#allocation0]]
  $region66: #{tpu_custom_call.1} parent=0
    _
  %s12 = ssub.s32 1, %s10
  %s13 = scalar_select 0, %s12, %s10
  $region1: #{tpu_custom_call.1} parent=0
    #allocation2 [shape = 'u8[4096]{0}', space=vmem, size = 0x1000, scoped, tag = 'input window, operand 0, single buffered']
    #allocation3 [shape = 's32[1]{0}', space=sflag, size = 0x4, scoped, tag = 'scoped memory for tpu_custom_call.1']
    #allocation4 [shape = 's32[1]{0}', space=sflag, size = 0x4, scoped, tag = 'scoped memory for tpu_custom_call.1']
    #allocation5 [shape = 'u8[16384]{0}', space=vmem, size = 0x4000, scoped, tag = 'input window, operand 1, single buffered']
    #allocation6 [shape = 's32[1]{0}', space=sflag, size = 0x4, scoped, tag = 'scoped memory for tpu_custom_call.1']
    #allocation7 [shape = 'u8[65536]{0}', space=vmem, size = 0x10000, scoped, tag = 'input window, operand 3, single buffered']
    #allocation8 [shape = 'u8[65536]{0}', space=vmem, size = 0x10000, scoped, tag = 'input window, operand 5, single buffered']
    #allocation9 [shape = 's32[1]{0}', space=sflag, size = 0x4, scoped, tag = 'scoped memory for tpu_custom_call.1']
    #allocation10 [shape = 'u8[65536]{0}', space=vmem, size = 0x10000, scoped, tag = 'input window, operand 7, single buffered']
    #allocation11 [shape = 'u8[4096]{0}', space=vmem, size = 0x1000, scoped, tag = 'output window, operand 0, single buffered']
    %14 = vsyncpa [#allocation3], 0
    %15 = vsyncpa [#allocation6], 0
    %16 = vsyncpa [#allocation9], 0
    %17 = vsyncpa [#allocation4], 0
    // Predicated region
    $region2: #{tpu_custom_call.1} parent=1 // pred_check
      _
    $region3: #{tpu_custom_call.1} parent=1 // pred_check_branch
      %19 = sbr.rel (0) target = $region5
    $region4: #{tpu_custom_call.1} parent=1 // pred_region
      %s21 = ssub.s32 128, 128
      %22 = vsyncadd [#allocation3], %s21
      %s24 = sshll.u32 [#allocation2], 4
      %s25 = int_to_ptr.vmem [resolvable:$true] %s24
      %27 = dma.hbm_to_vmem [thread:$0]  %s0, 128, %s25, [#allocation3]
    $region5: #{tpu_custom_call.1} parent=1 // pred_fallthru
      _
    // Predicated region
    $region6: #{tpu_custom_call.1} parent=1 // pred_check
      _
    $region7: #{tpu_custom_call.1} parent=1 // pred_check_branch
      %29 = sbr.rel (0) target = $region9
    $region8: #{tpu_custom_call.1} parent=1 // pred_region
      %s31 = ssub.s32 512, 512
      %32 = vsyncadd [#allocation6], %s31
      %s33 = sshll.u32 [#allocation5], 4
      %s34 = int_to_ptr.vmem [resolvable:$true] %s33
      %39 = dma.hbm_to_vmem [thread:$0]  %s1, 512, %s34, [#allocation6], 128, 128, 8
    $region9: #{tpu_custom_call.1} parent=1 // pred_fallthru
      _
    // Predicated region
    $region10: #{tpu_custom_call.1} parent=1 // pred_check
      _
    $region11: #{tpu_custom_call.1} parent=1 // pred_check_branch
      %41 = sbr.rel (0) target = $region13
    $region12: #{tpu_custom_call.1} parent=1 // pred_region
      _
    $region13: #{tpu_custom_call.1} parent=1 // pred_fallthru
      _
    // Predicated region
    $region14: #{tpu_custom_call.1} parent=1 // pred_check
      _
    $region15: #{tpu_custom_call.1} parent=1 // pred_check_branch
      %43 = sbr.rel (0) target = $region17
    $region16: #{tpu_custom_call.1} parent=1 // pred_region
      %s45 = ssub.s32 2048, 2048
      %46 = vsyncadd [#allocation6], %s45
      %s47 = sshll.u32 [#allocation7], 4
      %s48 = int_to_ptr.vmem [resolvable:$true] %s47
      %53 = dma.hbm_to_vmem [thread:$0]  %s3, 2048, %s48, [#allocation6], 128, 128, 8
    $region17: #{tpu_custom_call.1} parent=1 // pred_fallthru
      _
    // Predicated region
    $region18: #{tpu_custom_call.1} parent=1 // pred_check
      _
    $region19: #{tpu_custom_call.1} parent=1 // pred_check_branch
      %55 = sbr.rel (0) target = $region21
    $region20: #{tpu_custom_call.1} parent=1 // pred_region
      _
    $region21: #{tpu_custom_call.1} parent=1 // pred_fallthru
      _
    // Predicated region
    $region22: #{tpu_custom_call.1} parent=1 // pred_check
      _
    $region23: #{tpu_custom_call.1} parent=1 // pred_check_branch
      %57 = sbr.rel (0) target = $region25
    $region24: #{tpu_custom_call.1} parent=1 // pred_region
      %s59 = ssub.s32 2048, 2048
      %60 = vsyncadd [#allocation9], %s59
      %s61 = sshll.u32 [#allocation8], 4
      %s62 = int_to_ptr.vmem [resolvable:$true] %s61
      %67 = dma.hbm_to_vmem [thread:$0]  %s5, 2048, %s62, [#allocation9], 128, 128, 8
    $region25: #{tpu_custom_call.1} parent=1 // pred_fallthru
      _
    // Predicated region
    $region26: #{tpu_custom_call.1} parent=1 // pred_check
      _
    $region27: #{tpu_custom_call.1} parent=1 // pred_check_branch
      %69 = sbr.rel (0) target = $region29
    $region28: #{tpu_custom_call.1} parent=1 // pred_region
      _
    $region29: #{tpu_custom_call.1} parent=1 // pred_fallthru
      _
    // Predicated region
    $region30: #{tpu_custom_call.1} parent=1 // pred_check
      _
    $region31: #{tpu_custom_call.1} parent=1 // pred_check_branch
      %71 = sbr.rel (0) target = $region33
    $region32: #{tpu_custom_call.1} parent=1 // pred_region
      %s73 = ssub.s32 2048, 2048
      %74 = vsyncadd [#allocation9], %s73
      %s75 = sshll.u32 [#allocation10], 4
      %s76 = int_to_ptr.vmem [resolvable:$true] %s75
      %81 = dma.hbm_to_vmem [thread:$0]  %s7, 2048, %s76, [#allocation9], 128, 128, 8
    $region33: #{tpu_custom_call.1} parent=1 // pred_fallthru
      _
    // Predicated region
    $region34: #{tpu_custom_call.1} parent=1 // pred_check
      _
    $region35: #{tpu_custom_call.1} parent=1 // pred_check_branch
      %83 = sbr.rel (0) target = $region37
    $region36: #{tpu_custom_call.1} parent=1 // pred_region
      _
    $region37: #{tpu_custom_call.1} parent=1 // pred_fallthru
      _
    // Predicated region
    $region38: #{tpu_custom_call.1} parent=1 // pred_check
      _
    $region39: #{tpu_custom_call.1} parent=1 // pred_check_branch
      %85 = sbr.rel (0) target = $region41
    $region40: #{tpu_custom_call.1} parent=1 // pred_region
      %86 = dma.done [#allocation3], 128
    $region41: #{tpu_custom_call.1} parent=1 // pred_fallthru
      _
    // Predicated region
    $region42: #{tpu_custom_call.1} parent=1 // pred_check
      _
    $region43: #{tpu_custom_call.1} parent=1 // pred_check_branch
      %88 = sbr.rel (0) target = $region45
    $region44: #{tpu_custom_call.1} parent=1 // pred_region
      %89 = dma.done [#allocation6], 512
    $region45: #{tpu_custom_call.1} parent=1 // pred_fallthru
      _
    // Predicated region
    $region46: #{tpu_custom_call.1} parent=1 // pred_check
      _
    $region47: #{tpu_custom_call.1} parent=1 // pred_check_branch
      %91 = sbr.rel (0) target = $region49
    $region48: #{tpu_custom_call.1} parent=1 // pred_region
      %92 = dma.done [#allocation6], 2048
    $region49: #{tpu_custom_call.1} parent=1 // pred_fallthru
      _
    // Predicated region
    $region50: #{tpu_custom_call.1} parent=1 // pred_check
      _
    $region51: #{tpu_custom_call.1} parent=1 // pred_check_branch
      %94 = sbr.rel (0) target = $region53
    $region52: #{tpu_custom_call.1} parent=1 // pred_region
      %95 = dma.done [#allocation9], 2048
    $region53: #{tpu_custom_call.1} parent=1 // pred_fallthru
      _
    // Predicated region
    $region54: #{tpu_custom_call.1} parent=1 // pred_check
      _
    $region55: #{tpu_custom_call.1} parent=1 // pred_check_branch
      %97 = sbr.rel (0) target = $region57
    $region56: #{tpu_custom_call.1} parent=1 // pred_region
      %98 = dma.done [#allocation9], 2048
    $region57: #{tpu_custom_call.1} parent=1 // pred_fallthru
      _
    %v99 = vld [vmem:[#allocation2] sm:$0xff]
    %v100 = vld [vmem:[#allocation5] sm:$0xff]
    %v101 = vld [vmem:[#allocation5 + $0x8] sm:$0xff]
    %v102 = vld [vmem:[#allocation5 + $0x10] sm:$0xff]
    %v103 = vld [vmem:[#allocation5 + $0x18] sm:$0xff]
    %v104 = vld [vmem:[%s2] sm:$0x1]
    %v106 = vlaneseq
    %v107 = vshrl.u32 %v106, 7
    %v108 = vsub.s32 0, %v107
    %v109 = vrot.slane %v104, %v108
    %vm111 = vcmask 261120
    %v113 = vsel %vm111, %v99, 0
    %115 = vmatprep.subr.mxu0 0.0
    %116 = vmatpush1.msra.mxu0 %v100
    %117 = vmatprep.subr.mxu0 0.0
    %118 = vmatpush1.msra.mxu0 %v101
    %119 = vmatprep.subr.mxu0 0.0
    %120 = vmatpush1.msra.mxu0 %v102
    %121 = vmatprep.subr.mxu0 0.0
    %122 = vmatpush1.msra.mxu0 %v103
    %123 = vmatprep.subr.mxu0 0.0
    %124 = vmatpush1.msra.mxu0 0.0
    %125 = vmatprep.subr.mxu0 0.0
    %126 = vmatpush1.msra.mxu0 0.0
    %127 = vmatprep.subr.mxu0 0.0
    %128 = vmatpush1.msra.mxu0 0.0
    %129 = vmatprep.subr.mxu0 0.0
    %130 = vmatpush1.msra.mxu0 0.0
    %131 = vmatprep.subr.mxu0 0.0
    %132 = vmatpush1.msra.mxu0 0.0
    %133 = vmatprep.subr.mxu0 0.0
    %134 = vmatpush1.msra.mxu0 0.0
    %135 = vmatprep.subr.mxu0 0.0
    %136 = vmatpush1.msra.mxu0 0.0
    %137 = vmatprep.subr.mxu0 0.0
    %138 = vmatpush1.msra.mxu0 0.0
    %139 = vmatprep.subr.mxu0 0.0
    %140 = vmatpush1.msra.mxu0 0.0
    %141 = vmatprep.subr.mxu0 0.0
    %142 = vmatpush1.msra.mxu0 0.0
    %143 = vmatprep.subr.mxu0 0.0
    %144 = vmatpush1.msra.mxu0 0.0
    %145 = vmatprep.subr.mxu0 0.0
    %146 = vmatpush1.msra.mxu0 0.0
    %147 = vmatprep.subr.mxu0 0.0
    %148 = vmatpush1.msra.mxu0 0.0
    %149 = vmatprep.subr.mxu0 0.0
    %150 = vmatpush1.msra.mxu0 0.0
    %151 = vmatprep.subr.mxu0 0.0
    %152 = vmatpush1.msra.mxu0 0.0
    %153 = vmatprep.subr.mxu0 0.0
    %154 = vmatpush1.msra.mxu0 0.0
    %155 = vmatprep.subr.mxu0 0.0
    %156 = vmatpush1.msra.mxu0 0.0
    %157 = vmatprep.subr.mxu0 0.0
    %158 = vmatpush1.msra.mxu0 0.0
    %159 = vmatprep.subr.mxu0 0.0
    %160 = vmatpush1.msra.mxu0 0.0
    %161 = vmatprep.subr.mxu0 0.0
    %162 = vmatpush1.msra.mxu0 0.0
    %163 = vmatprep.subr.mxu0 0.0
    %164 = vmatpush1.msra.mxu0 0.0
    %165 = vmatprep.subr.mxu0 0.0
    %166 = vmatpush1.msra.mxu0 0.0
    %167 = vmatprep.subr.mxu0 0.0
    %168 = vmatpush1.msra.mxu0 0.0
    %169 = vmatprep.subr.mxu0 0.0
    %170 = vmatpush1.msra.mxu0 0.0
    %171 = vmatprep.subr.mxu0 0.0
    %172 = vmatpush1.msra.mxu0 0.0
    %173 = vmatprep.subr.mxu0 0.0
    %174 = vmatpush1.msra.mxu0 0.0
    %175 = vmatprep.subr.mxu0 0.0
    %176 = vmatpush1.msra.mxu0 0.0
    %177 = vmatprep.subr.mxu0 0.0
    %178 = vmatpush1.msra.mxu0 0.0
    %179 = vmatprep.mubr.f32.mxu0 0.0
    %180 = vmatmul.mubr.f32.gmra.mrb[0].mxu0 %v113
    %v181 = vpop.f32.mrb[0].mxu0
    %v182 = vadd.f32 %v109, %v181
    %v183 = vpop.f32.mrb[0].mxu0
    %184 = vdwg.mxu0
    %v185 = vmax.f32 %v182, 0.0
    %v186 = vld [vmem:[#allocation7] sm:$0xff]
    %v187 = vld [vmem:[#allocation7 + $0x8] sm:$0xff]
    %v188 = vld [vmem:[#allocation7 + $0x10] sm:$0xff]
    %v189 = vld [vmem:[#allocation7 + $0x18] sm:$0xff]
    %v190 = vld [vmem:[#allocation7 + $0x20] sm:$0xff]
    %v191 = vld [vmem:[#allocation7 + $0x28] sm:$0xff]
    %v192 = vld [vmem:[#allocation7 + $0x30] sm:$0xff]
    %v193 = vld [vmem:[#allocation7 + $0x38] sm:$0xff]
    %v194 = vld [vmem:[#allocation7 + $0x40] sm:$0xff]
    %v195 = vld [vmem:[#allocation7 + $0x48] sm:$0xff]
    %v196 = vld [vmem:[#allocation7 + $0x50] sm:$0xff]
    %v197 = vld [vmem:[#allocation7 + $0x58] sm:$0xff]
    %v198 = vld [vmem:[#allocation7 + $0x60] sm:$0xff]
    %v199 = vld [vmem:[#allocation7 + $0x68] sm:$0xff]
    %v200 = vld [vmem:[#allocation7 + $0x70] sm:$0xff]
    %v201 = vld [vmem:[#allocation7 + $0x78] sm:$0xff]
    %v202 = vld [vmem:[%s4] sm:$0x1]
    %v204 = vlaneseq
    %v205 = vshrl.u32 %v204, 7
    %v206 = vsub.s32 0, %v205
    %v207 = vrot.slane %v202, %v206
    %209 = vmatprep.subr.mxu0 0.0
    %210 = vmatpush1.msra.mxu0 %v186
    %211 = vmatprep.subr.mxu0 0.0
    %212 = vmatpush1.msra.mxu0 %v187
    %213 = vmatprep.subr.mxu0 0.0
    %214 = vmatpush1.msra.mxu0 %v188
    %215 = vmatprep.subr.mxu0 0.0
    %216 = vmatpush1.msra.mxu0 %v189
    %217 = vmatprep.subr.mxu0 0.0
    %218 = vmatpush1.msra.mxu0 %v190
    %219 = vmatprep.subr.mxu0 0.0
    %220 = vmatpush1.msra.mxu0 %v191
    %221 = vmatprep.subr.mxu0 0.0
    %222 = vmatpush1.msra.mxu0 %v192
    %223 = vmatprep.subr.mxu0 0.0
    %224 = vmatpush1.msra.mxu0 %v193
    %225 = vmatprep.subr.mxu0 0.0
    %226 = vmatpush1.msra.mxu0 %v194
    %227 = vmatprep.subr.mxu0 0.0
    %228 = vmatpush1.msra.mxu0 %v195
    %229 = vmatprep.subr.mxu0 0.0
    %230 = vmatpush1.msra.mxu0 %v196
    %231 = vmatprep.subr.mxu0 0.0
    %232 = vmatpush1.msra.mxu0 %v197
    %233 = vmatprep.subr.mxu0 0.0
    %234 = vmatpush1.msra.mxu0 %v198
    %235 = vmatprep.subr.mxu0 0.0
    %236 = vmatpush1.msra.mxu0 %v199
    %237 = vmatprep.subr.mxu0 0.0
    %238 = vmatpush1.msra.mxu0 %v200
    %239 = vmatprep.subr.mxu0 0.0
    %240 = vmatpush1.msra.mxu0 %v201
    %241 = vmatprep.subr.mxu0 0.0
    %242 = vmatpush1.msra.mxu0 0.0
    %243 = vmatprep.subr.mxu0 0.0
    %244 = vmatpush1.msra.mxu0 0.0
    %245 = vmatprep.subr.mxu0 0.0
    %246 = vmatpush1.msra.mxu0 0.0
    %247 = vmatprep.subr.mxu0 0.0
    %248 = vmatpush1.msra.mxu0 0.0
    %249 = vmatprep.subr.mxu0 0.0
    %250 = vmatpush1.msra.mxu0 0.0
    %251 = vmatprep.subr.mxu0 0.0
    %252 = vmatpush1.msra.mxu0 0.0
    %253 = vmatprep.subr.mxu0 0.0
    %254 = vmatpush1.msra.mxu0 0.0
    %255 = vmatprep.subr.mxu0 0.0
    %256 = vmatpush1.msra.mxu0 0.0
    %257 = vmatprep.subr.mxu0 0.0
    %258 = vmatpush1.msra.mxu0 0.0
    %259 = vmatprep.subr.mxu0 0.0
    %260 = vmatpush1.msra.mxu0 0.0
    %261 = vmatprep.subr.mxu0 0.0
    %262 = vmatpush1.msra.mxu0 0.0
    %263 = vmatprep.subr.mxu0 0.0
    %264 = vmatpush1.msra.mxu0 0.0
    %265 = vmatprep.subr.mxu0 0.0
    %266 = vmatpush1.msra.mxu0 0.0
    %267 = vmatprep.subr.mxu0 0.0
    %268 = vmatpush1.msra.mxu0 0.0
    %269 = vmatprep.subr.mxu0 0.0
    %270 = vmatpush1.msra.mxu0 0.0
    %271 = vmatprep.subr.mxu0 0.0
    %272 = vmatpush1.msra.mxu0 0.0
    %273 = vmatprep.mubr.f32.mxu0 0.0
    %274 = vmatmul.mubr.f32.gmra.mrb[0].mxu0 %v185
    %v275 = vpop.f32.mrb[0].mxu0
    %v276 = vadd.f32 %v207, %v275
    %v277 = vpop.f32.mrb[0].mxu0
    %278 = vdwg.mxu0
    %v279 = vmax.f32 %v276, 0.0
    %v280 = vld [vmem:[#allocation8] sm:$0xff]
    %v281 = vld [vmem:[#allocation8 + $0x8] sm:$0xff]
    %v282 = vld [vmem:[#allocation8 + $0x10] sm:$0xff]
    %v283 = vld [vmem:[#allocation8 + $0x18] sm:$0xff]
    %v284 = vld [vmem:[#allocation8 + $0x20] sm:$0xff]
    %v285 = vld [vmem:[#allocation8 + $0x28] sm:$0xff]
    %v286 = vld [vmem:[#allocation8 + $0x30] sm:$0xff]
    %v287 = vld [vmem:[#allocation8 + $0x38] sm:$0xff]
    %v288 = vld [vmem:[#allocation8 + $0x40] sm:$0xff]
    %v289 = vld [vmem:[#allocation8 + $0x48] sm:$0xff]
    %v290 = vld [vmem:[#allocation8 + $0x50] sm:$0xff]
    %v291 = vld [vmem:[#allocation8 + $0x58] sm:$0xff]
    %v292 = vld [vmem:[#allocation8 + $0x60] sm:$0xff]
    %v293 = vld [vmem:[#allocation8 + $0x68] sm:$0xff]
    %v294 = vld [vmem:[#allocation8 + $0x70] sm:$0xff]
    %v295 = vld [vmem:[#allocation8 + $0x78] sm:$0xff]
    %v296 = vld [vmem:[%s6] sm:$0x1]
    %v298 = vlaneseq
    %v299 = vshrl.u32 %v298, 7
    %v300 = vsub.s32 0, %v299
    %v301 = vrot.slane %v296, %v300
    %303 = vmatprep.subr.mxu0 0.0
    %304 = vmatpush1.msra.mxu0 %v280
    %305 = vmatprep.subr.mxu0 0.0
    %306 = vmatpush1.msra.mxu0 %v281
    %307 = vmatprep.subr.mxu0 0.0
    %308 = vmatpush1.msra.mxu0 %v282
    %309 = vmatprep.subr.mxu0 0.0
    %310 = vmatpush1.msra.mxu0 %v283
    %311 = vmatprep.subr.mxu0 0.0
    %312 = vmatpush1.msra.mxu0 %v284
    %313 = vmatprep.subr.mxu0 0.0
    %314 = vmatpush1.msra.mxu0 %v285
    %315 = vmatprep.subr.mxu0 0.0
    %316 = vmatpush1.msra.mxu0 %v286
    %317 = vmatprep.subr.mxu0 0.0
    %318 = vmatpush1.msra.mxu0 %v287
    %319 = vmatprep.subr.mxu0 0.0
    %320 = vmatpush1.msra.mxu0 %v288
    %321 = vmatprep.subr.mxu0 0.0
    %322 = vmatpush1.msra.mxu0 %v289
    %323 = vmatprep.subr.mxu0 0.0
    %324 = vmatpush1.msra.mxu0 %v290
    %325 = vmatprep.subr.mxu0 0.0
    %326 = vmatpush1.msra.mxu0 %v291
    %327 = vmatprep.subr.mxu0 0.0
    %328 = vmatpush1.msra.mxu0 %v292
    %329 = vmatprep.subr.mxu0 0.0
    %330 = vmatpush1.msra.mxu0 %v293
    %331 = vmatprep.subr.mxu0 0.0
    %332 = vmatpush1.msra.mxu0 %v294
    %333 = vmatprep.subr.mxu0 0.0
    %334 = vmatpush1.msra.mxu0 %v295
    %335 = vmatprep.subr.mxu0 0.0
    %336 = vmatpush1.msra.mxu0 0.0
    %337 = vmatprep.subr.mxu0 0.0
    %338 = vmatpush1.msra.mxu0 0.0
    %339 = vmatprep.subr.mxu0 0.0
    %340 = vmatpush1.msra.mxu0 0.0
    %341 = vmatprep.subr.mxu0 0.0
    %342 = vmatpush1.msra.mxu0 0.0
    %343 = vmatprep.subr.mxu0 0.0
    %344 = vmatpush1.msra.mxu0 0.0
    %345 = vmatprep.subr.mxu0 0.0
    %346 = vmatpush1.msra.mxu0 0.0
    %347 = vmatprep.subr.mxu0 0.0
    %348 = vmatpush1.msra.mxu0 0.0
    %349 = vmatprep.subr.mxu0 0.0
    %350 = vmatpush1.msra.mxu0 0.0
    %351 = vmatprep.subr.mxu0 0.0
    %352 = vmatpush1.msra.mxu0 0.0
    %353 = vmatprep.subr.mxu0 0.0
    %354 = vmatpush1.msra.mxu0 0.0
    %355 = vmatprep.subr.mxu0 0.0
    %356 = vmatpush1.msra.mxu0 0.0
    %357 = vmatprep.subr.mxu0 0.0
    %358 = vmatpush1.msra.mxu0 0.0
    %359 = vmatprep.subr.mxu0 0.0
    %360 = vmatpush1.msra.mxu0 0.0
    %361 = vmatprep.subr.mxu0 0.0
    %362 = vmatpush1.msra.mxu0 0.0
    %363 = vmatprep.subr.mxu0 0.0
    %364 = vmatpush1.msra.mxu0 0.0
    %365 = vmatprep.subr.mxu0 0.0
    %366 = vmatpush1.msra.mxu0 0.0
    %367 = vmatprep.mubr.f32.mxu0 0.0
    %368 = vmatmul.mubr.f32.gmra.mrb[0].mxu0 %v279
    %v369 = vpop.f32.mrb[0].mxu0
    %v370 = vadd.f32 %v301, %v369
    %v371 = vpop.f32.mrb[0].mxu0
    %372 = vdwg.mxu0
    %v373 = vmax.f32 %v370, 0.0
    %v374 = vld [vmem:[#allocation10] sm:$0xff]
    %v375 = vld [vmem:[#allocation10 + $0x8] sm:$0xff]
    %v376 = vld [vmem:[#allocation10 + $0x10] sm:$0xff]
    %v377 = vld [vmem:[#allocation10 + $0x18] sm:$0xff]
    %v378 = vld [vmem:[#allocation10 + $0x20] sm:$0xff]
    %v379 = vld [vmem:[#allocation10 + $0x28] sm:$0xff]
    %v380 = vld [vmem:[#allocation10 + $0x30] sm:$0xff]
    %v381 = vld [vmem:[#allocation10 + $0x38] sm:$0xff]
    %v382 = vld [vmem:[#allocation10 + $0x40] sm:$0xff]
    %v383 = vld [vmem:[#allocation10 + $0x48] sm:$0xff]
    %v384 = vld [vmem:[#allocation10 + $0x50] sm:$0xff]
    %v385 = vld [vmem:[#allocation10 + $0x58] sm:$0xff]
    %v386 = vld [vmem:[#allocation10 + $0x60] sm:$0xff]
    %v387 = vld [vmem:[#allocation10 + $0x68] sm:$0xff]
    %v388 = vld [vmem:[#allocation10 + $0x70] sm:$0xff]
    %v389 = vld [vmem:[#allocation10 + $0x78] sm:$0xff]
    %v390 = vld [vmem:[%s8] sm:$0x1]
    %v392 = vlaneseq
    %v393 = vshrl.u32 %v392, 7
    %v394 = vsub.s32 0, %v393
    %v395 = vrot.slane %v390, %v394
    %397 = vmatprep.subr.mxu0 0.0
    %398 = vmatpush1.msra.mxu0 %v374
    %399 = vmatprep.subr.mxu0 0.0
    %400 = vmatpush1.msra.mxu0 %v375
    %401 = vmatprep.subr.mxu0 0.0
    %402 = vmatpush1.msra.mxu0 %v376
    %403 = vmatprep.subr.mxu0 0.0
    %404 = vmatpush1.msra.mxu0 %v377
    %405 = vmatprep.subr.mxu0 0.0
    %406 = vmatpush1.msra.mxu0 %v378
    %407 = vmatprep.subr.mxu0 0.0
    %408 = vmatpush1.msra.mxu0 %v379
    %409 = vmatprep.subr.mxu0 0.0
    %410 = vmatpush1.msra.mxu0 %v380
    %411 = vmatprep.subr.mxu0 0.0
    %412 = vmatpush1.msra.mxu0 %v381
    %413 = vmatprep.subr.mxu0 0.0
    %414 = vmatpush1.msra.mxu0 %v382
    %415 = vmatprep.subr.mxu0 0.0
    %416 = vmatpush1.msra.mxu0 %v383
    %417 = vmatprep.subr.mxu0 0.0
    %418 = vmatpush1.msra.mxu0 %v384
    %419 = vmatprep.subr.mxu0 0.0
    %420 = vmatpush1.msra.mxu0 %v385
    %421 = vmatprep.subr.mxu0 0.0
    %422 = vmatpush1.msra.mxu0 %v386
    %423 = vmatprep.subr.mxu0 0.0
    %424 = vmatpush1.msra.mxu0 %v387
    %425 = vmatprep.subr.mxu0 0.0
    %426 = vmatpush1.msra.mxu0 %v388
    %427 = vmatprep.subr.mxu0 0.0
    %428 = vmatpush1.msra.mxu0 %v389
    %429 = vmatprep.subr.mxu0 0.0
    %430 = vmatpush1.msra.mxu0 0.0
    %431 = vmatprep.subr.mxu0 0.0
    %432 = vmatpush1.msra.mxu0 0.0
    %433 = vmatprep.subr.mxu0 0.0
    %434 = vmatpush1.msra.mxu0 0.0
    %435 = vmatprep.subr.mxu0 0.0
    %436 = vmatpush1.msra.mxu0 0.0
    %437 = vmatprep.subr.mxu0 0.0
    %438 = vmatpush1.msra.mxu0 0.0
    %439 = vmatprep.subr.mxu0 0.0
    %440 = vmatpush1.msra.mxu0 0.0
    %441 = vmatprep.subr.mxu0 0.0
    %442 = vmatpush1.msra.mxu0 0.0
    %443 = vmatprep.subr.mxu0 0.0
    %444 = vmatpush1.msra.mxu0 0.0
    %445 = vmatprep.subr.mxu0 0.0
    %446 = vmatpush1.msra.mxu0 0.0
    %447 = vmatprep.subr.mxu0 0.0
    %448 = vmatpush1.msra.mxu0 0.0
    %449 = vmatprep.subr.mxu0 0.0
    %450 = vmatpush1.msra.mxu0 0.0
    %451 = vmatprep.subr.mxu0 0.0
    %452 = vmatpush1.msra.mxu0 0.0
    %453 = vmatprep.subr.mxu0 0.0
    %454 = vmatpush1.msra.mxu0 0.0
    %455 = vmatprep.subr.mxu0 0.0
    %456 = vmatpush1.msra.mxu0 0.0
    %457 = vmatprep.subr.mxu0 0.0
    %458 = vmatpush1.msra.mxu0 0.0
    %459 = vmatprep.subr.mxu0 0.0
    %460 = vmatpush1.msra.mxu0 0.0
    %461 = vmatprep.mubr.f32.mxu0 0.0
    %462 = vmatmul.mubr.f32.gmra.mrb[0].mxu0 %v373
    %v463 = vpop.f32.mrb[0].mxu0
    %v464 = vadd.f32 %v395, %v463
    %v465 = vpop.f32.mrb[0].mxu0
    %466 = vdwg.mxu0
    %467 = vst [vmem:[#allocation11] sm:$0xff] %v464
    // Predicated region
    $region58: #{tpu_custom_call.1} parent=1 // pred_check
      _
    $region59: #{tpu_custom_call.1} parent=1 // pred_check_branch
      %469 = sbr.rel (0) target = $region61
    $region60: #{tpu_custom_call.1} parent=1 // pred_region
      %s471 = ssub.s32 128, 128
      %472 = vsyncadd [#allocation4], %s471
      %s474 = sshll.u32 [#allocation11], 4
      %s475 = int_to_ptr.vmem [resolvable:$true] %s474
      %477 = dma.vmem_to_hbm [thread:$0]  %s475, 128, %s9, [#allocation4]
    $region61: #{tpu_custom_call.1} parent=1 // pred_fallthru
      _
    // Predicated region
    $region62: #{tpu_custom_call.1} parent=1 // pred_check
      _
    $region63: #{tpu_custom_call.1} parent=1 // pred_check_branch
      %479 = sbr.rel (0) target = $region65
    $region64: #{tpu_custom_call.1} parent=1 // pred_region
      %480 = dma.done [#allocation4], 128
    $region65: #{tpu_custom_call.1} parent=1 // pred_fallthru
      _
    %481 = vsyncpa [#allocation3], 1
    %482 = vsyncpa [#allocation6], 1
    %483 = vsyncpa [#allocation9], 1
    %484 = vsyncpa [#allocation4], 1

</llo_original>
